<compile_context>
chip_gen: v7x
topology: tpu7x:2x2x1
jax: 0.10.0
libtpu: 0.0.40
codegen_flags: <defaults>
</compile_context>

<pallas_src>
import functools

import jax
import jax.numpy as jnp
from jax import lax
from jax.experimental import pallas as pl
from jax.experimental.pallas import tpu as pltpu

LANES = 128
SCALE = 2988.0   # GetScore: sum(m * s * 2988)
EDGE_R = 300.0   # edge score r (forward hard-codes 300)
LAM = 510.3      # lambda (forward hard-codes 510.3; its k=28 term cancels)
_OFF = 8         # sublane-aligned interior offset of the masked-state scratch


def _gibbs_kernel(am_ref, init_ref, thr_ref, out_ref, m_ref, *,
                  k, L, unroll, batch_3d):
    """One batch block; one Gibbs sweep per grid step along grid axis 1.

    Update rule (base term already folded into thr by the wrapper):
        iter[t] <- 1   iff   thr[t] < am[t] * (m[t-1] + m[t+1])
    """
    sw = pl.program_id(1)

    # Layout helpers (2-D: (rows, lanes); 3-D: (rows, sublanes, 128)).
    if batch_3d:
        def row(ref, i):
            return ref[pl.ds(i, 1), :, :]

        def set_row(ref, i, v):
            ref[pl.ds(i, 1), :, :] = v

        def slab(ref, a, b):
            return ref[a:b, :, :]

        def set_slab(ref, a, b, v):
            ref[a:b, :, :] = v
    else:
        def row(ref, i):
            return ref[pl.ds(i, 1), :]

        def set_row(ref, i, v):
            ref[pl.ds(i, 1), :] = v

        def slab(ref, a, b):
            return ref[a:b, :]

        def set_slab(ref, a, b, v):
            ref[a:b, :] = v

    # Prologue (once per batch block): masked init state in a zero-padded
    # scratch so the neighbour reads at t=0 / t=L-1 need no branches.
    @pl.when(sw == 0)
    def _():
        m_ref[...] = jnp.zeros(m_ref.shape, m_ref.dtype)
        set_slab(m_ref, _OFF, _OFF + L, init_ref[...] * am_ref[...])

    row_shape = (1,) + am_ref.shape[1:]
    zeros_row = jnp.zeros(row_shape, jnp.float32)

    if k == 1:
        last = pl.num_programs(1) - 1

        def make_step(write_out, write_m):
            def step(i, left):
                am_t = row(am_ref, i)
                right = row(m_ref, i + _OFF + 1)      # masked iter[t+1]
                thr_t = row(thr_ref, i)
                d = am_t * (left + right)             # delta/300 (base in thr)
                z = thr_t < d                         # Bernoulli(sigmoid(delta))
                new_m = jnp.where(z, am_t, zeros_row)
                if write_m:
                    set_row(m_ref, i + _OFF, new_m)
                if write_out:
                    set_row(out_ref, i, z.astype(out_ref.dtype))
                return new_m                          # carried left neighbour
            return step

        # Warm sweeps (0 .. r-2): only the masked state has to advance.
        @pl.when(sw < last)
        def _():
            lax.fori_loop(0, L, make_step(False, True), zeros_row,
                          unroll=unroll)

        # Final sweep: every position is rewritten, so only the output store
        # is needed; the left neighbour lives in the fori_loop carry.
        @pl.when(sw == last)
        def _():
            lax.fori_loop(0, L, make_step(True, False), zeros_row,
                          unroll=unroll)
    else:
        # k >= 2: visited positions (t % k == 0) never neighbour each other,
        # so every update only sees the never-modified init state.  One fully
        # vectorised pass over shifted slabs; wrapper runs a single sweep.
        left_all = slab(m_ref, _OFF - 1, _OFF + L - 1)    # masked iter[t-1]
        right_all = slab(m_ref, _OFF + 1, _OFF + L + 1)   # masked iter[t+1]
        d = am_ref[...] * (left_all + right_all)
        z = thr_ref[...] < d
        pos = lax.broadcasted_iota(jnp.int32, d.shape, 0)
        visited = (pos % k) == 0
        out_ref[...] = jnp.where(visited, z.astype(out_ref.dtype),
                                 init_ref[...].astype(out_ref.dtype))


def gibbs_sampler(attention_mask, s, key, *, r=1, k=1, batch_block=None):
    """Pallas equivalent of GibbsSampler(device, L, r=r, k=k)(attention_mask, s).

    attention_mask, s : (B, L) arrays.  Returns (B, L) int32 samples in {0,1}.
    """
    assert r >= 1 and k >= 1
    B, L = s.shape
    assert attention_mask.shape == (B, L)

    # ---- batch padding / tiling (lane-dense; >= 2 blocks when possible so a
    # v7x megacore can shard independent chains across its two TensorCores).
    Bp = ((B + LANES - 1) // LANES) * LANES
    c_tot = Bp // LANES
    if batch_block is None:
        c_blk = c_tot // 2 if (c_tot % 2 == 0 and (c_tot // 2) % 8 == 0) else c_tot
    else:
        assert batch_block % LANES == 0 and Bp % batch_block == 0
        c_blk = batch_block // LANES
        assert c_blk == c_tot or c_blk % 8 == 0
    nb = c_tot // c_blk
    tb = c_blk * LANES
    # Sublane-dense 3-D layout only pays once a block spans >= 8 lane groups.
    batch_3d = c_blk % 8 == 0

    # k >= 2: neighbours are never updated, so every sweep is i.i.d. and only
    # the last one survives -> run a single sweep.
    r_eff = r if k == 1 else 1

    am = attention_mask.astype(jnp.float32)
    sf = s.astype(jnp.float32)

    k_init, k_u = jax.random.split(key)
    # TODO(synk): RNG streams differ from torch (randint / Categorical) -- the
    # result is statistically, not bitwise, equivalent.
    init = jax.random.randint(k_init, (B, L), 0, 2).astype(jnp.float32)

    # Thresholds: u < sigmoid(delta)  <=>  (logit(u) - base)/300 < am*(m_l+m_r)
    # with base = am*(2988*s - 510.3) folded wrapper-side (no exp/div in-kernel).
    u = jax.random.uniform(k_u, (r_eff, L, B), dtype=jnp.float32)
    base_t = (am * (SCALE * sf - LAM)).T                          # (L, B)
    thr = (jnp.log(u) - jnp.log1p(-u) - base_t[None]) / EDGE_R    # (r_eff, L, B)

    # Per-sweep threshold blocks are streamed through the grid; in the 2-D
    # layout their leading (sublane) dim must be 8-aligned when r_eff > 1.
    rows_per_sweep = L
    if (not batch_3d) and r_eff > 1 and L % 8 != 0:
        rows_per_sweep = ((L + 7) // 8) * 8
        thr = jnp.pad(thr, ((0, 0), (0, rows_per_sweep - L), (0, 0)))
    thr = thr.reshape(r_eff * rows_per_sweep, B)

    def to_layout(x):  # (rows, B) -> padded (rows, Bp) or (rows, c_tot, 128)
        xp = jnp.pad(x, ((0, 0), (0, Bp - B)))
        if batch_3d:
            xp = xp.reshape(x.shape[0], c_tot, LANES)
        return xp

    am_b = to_layout(am.T)
    init_b = to_layout(init.T)
    thr_b = to_layout(thr)

    if batch_3d:
        blk = lambda rows: (rows, c_blk, LANES)
        idx_const = lambda j, sw: (0, j, 0)
        idx_thr = lambda j, sw: (sw, j, 0)
        out_struct = jax.ShapeDtypeStruct((L, c_tot, LANES), jnp.int32)
        scratch = pltpu.VMEM((L + 2 * _OFF, c_blk, LANES), jnp.float32)
    else:
        blk = lambda rows: (rows, tb)
        idx_const = lambda j, sw: (0, j)
        idx_thr = lambda j, sw: (sw, j)
        out_struct = jax.ShapeDtypeStruct((L, Bp), jnp.int32)
        scratch = pltpu.VMEM((L + 2 * _OFF, tb), jnp.float32)

    unroll = True if L <= 64 else 8
    kernel = functools.partial(_gibbs_kernel, k=k, L=L, unroll=unroll,
                               batch_3d=batch_3d)

    # VMEM budget hint: am/init/out blocks + streamed threshold block (all
    # double-buffered by the pipeline) + masked-state scratch + slack.
    block_bytes = 4 * L * tb
    need = (2 * 3 * block_bytes + 2 * 4 * rows_per_sweep * tb
            + 4 * (L + 2 * _OFF) * tb + (2 << 20))
    vmem_limit = int(min(max(need, 32 << 20), 96 << 20))

    out_b = pl.pallas_call(
        kernel,
        # TODO(synk): PyTorch returns int64; TPU kernel emits int32 (values 0/1).
        out_shape=out_struct,
        grid_spec=pltpu.PrefetchScalarGridSpec(
            num_scalar_prefetch=0,
            grid=(nb, r_eff),
            in_specs=[
                pl.BlockSpec(blk(L), idx_const),               # attention_mask^T
                pl.BlockSpec(blk(L), idx_const),               # init^T
                pl.BlockSpec(blk(rows_per_sweep), idx_thr),    # thresholds (per sweep)
            ],
            out_specs=pl.BlockSpec(blk(L), idx_const),
            scratch_shapes=[scratch],                          # masked state
        ),
        compiler_params=pltpu.CompilerParams(
            dimension_semantics=("parallel", "arbitrary"),
            vmem_limit_bytes=vmem_limit),
    )(am_b, init_b, thr_b)

    out = out_b.reshape(L, Bp) if batch_3d else out_b
    return out[:, :B].T                                        # (B, L)


if __name__ == "__main__":
    key = jax.random.PRNGKey(0)
    k_data, k_sample = jax.random.split(key)

    B, L = 2, 8  # small shapes consistent with (batch, sequence_length)
    s = jax.random.normal(k_data, (B, L), dtype=jnp.float32)
    attention_mask = jnp.ones((B, L), dtype=jnp.float32)
    attention_mask = attention_mask.at[1, 6:].set(0.0)  # exercise masking

    out = gibbs_sampler(attention_mask, s, k_sample, r=1, k=1)
    out = jax.block_until_ready(out)

    assert out.shape == (B, L), out.shape
    assert out.dtype == jnp.int32, out.dtype
    assert bool(jnp.all((out == 0) | (out == 1)))
    print("KERNEL_OK")
</pallas_src>

<mosaic_0001>
module attributes {stable_mosaic.version = 11 : i64} {
  func.func @_gibbs_kernel(%arg0: i32, %arg1: i32, %arg2: memref<8x128xf32, #tpu.memory_space<vmem>>, %arg3: memref<8x128xf32, #tpu.memory_space<vmem>>, %arg4: memref<8x128xf32, #tpu.memory_space<vmem>>, %arg5: memref<8x128xi32, #tpu.memory_space<vmem>>, %arg6: memref<24x128xf32, #tpu.memory_space<vmem>>) attributes {dimension_semantics = [#tpu.dimension_semantics<parallel>, #tpu.dimension_semantics<arbitrary>], iteration_bounds = array<i64: 1, 1>, scalar_prefetch = 0 : i64, scratch_operands = 1 : i64, tpu.core_type = #tpu.core_type<tc>, window_params = [{transform_indices = @transform_0, window_bounds = array<i64: 8, 128>}, {transform_indices = @transform_1, window_bounds = array<i64: 8, 128>}, {transform_indices = @transform_2, window_bounds = array<i64: 8, 128>}, {transform_indices = @transform_3, window_bounds = array<i64: 8, 128>}]} {
    %c0_i32 = arith.constant 0 : i32
    %0 = arith.cmpi eq, %arg1, %c0_i32 : i32
    %1 = arith.extui %0 : i1 to i32
    %c0_i32_0 = arith.constant 0 : i32
    %2 = arith.cmpi ne, %1, %c0_i32_0 : i32
    scf.if %2 {
      %cst_5 = arith.constant 0.000000e+00 : f32
      %10 = vector.broadcast %cst_5 : f32 to vector<24x128xf32>
      %c0 = arith.constant 0 : index
      %c0_6 = arith.constant 0 : index
      %11 = vector.load %arg6[%c0, %c0_6] : memref<24x128xf32, #tpu.memory_space<vmem>>, vector<24x128xf32>
      tpu.vector_store %arg6[%c0, %c0_6], %10 {strides = array<i32>} : memref<24x128xf32, #tpu.memory_space<vmem>>, vector<24x128xf32>,
      %c0_7 = arith.constant 0 : index
      %c0_8 = arith.constant 0 : index
      %12 = vector.load %arg3[%c0_7, %c0_8] : memref<8x128xf32, #tpu.memory_space<vmem>>, vector<8x128xf32>
      %c0_9 = arith.constant 0 : index
      %c0_10 = arith.constant 0 : index
      %13 = vector.load %arg2[%c0_9, %c0_10] : memref<8x128xf32, #tpu.memory_space<vmem>>, vector<8x128xf32>
      %14 = arith.mulf %12, %13 : vector<8x128xf32>
      %c8 = arith.constant 8 : index
      %c0_11 = arith.constant 0 : index
      %15 = vector.load %arg6[%c8, %c0_11] : memref<24x128xf32, #tpu.memory_space<vmem>>, vector<8x128xf32>
      tpu.vector_store %arg6[%c8, %c0_11], %14 {strides = array<i32>} : memref<24x128xf32, #tpu.memory_space<vmem>>, vector<8x128xf32>,
    } else {
    }
    %cst = arith.constant 0.000000e+00 : f32
    %3 = vector.broadcast %cst : f32 to vector<1x128xf32>
    %c0_i32_1 = arith.constant 0 : i32
    %4 = arith.cmpi slt, %arg1, %c0_i32_1 : i32
    %5 = arith.extui %4 : i1 to i32
    %c0_i32_2 = arith.constant 0 : i32
    %6 = arith.cmpi ne, %5, %c0_i32_2 : i32
    scf.if %6 {
      %c0_i32_5 = arith.constant 0 : i32
      %10 = arith.index_cast %c0_i32_5 : i32 to index
      %c0 = arith.constant 0 : index
      %11 = vector.load %arg2[%10, %c0] : memref<8x128xf32, #tpu.memory_space<vmem>>, vector<1x128xf32>
      %c8_i32 = arith.constant 8 : i32
      %12 = arith.addi %c0_i32_5, %c8_i32 : i32
      %c1_i32 = arith.constant 1 : i32
      %13 = arith.addi %12, %c1_i32 : i32
      %14 = arith.index_cast %13 : i32 to index
      %c0_6 = arith.constant 0 : index
      %15 = vector.load %arg6[%14, %c0_6] : memref<24x128xf32, #tpu.memory_space<vmem>>, vector<1x128xf32>
      %16 = arith.index_cast %c0_i32_5 : i32 to index
      %c0_7 = arith.constant 0 : index
      %17 = vector.load %arg4[%16, %c0_7] : memref<8x128xf32, #tpu.memory_space<vmem>>, vector<1x128xf32>
      %18 = arith.addf %3, %15 : vector<1x128xf32>
      %19 = arith.mulf %11, %18 : vector<1x128xf32>
      %20 = arith.cmpf olt, %17, %19 : vector<1x128xf32>
      %21 = arith.select %20, %11, %3 : vector<1x128xi1>, vector<1x128xf32>
      %c8_i32_8 = arith.constant 8 : i32
      %22 = arith.addi %c0_i32_5, %c8_i32_8 : i32
      %23 = arith.index_cast %22 : i32 to index
      %c0_9 = arith.constant 0 : index
      %24 = vector.load %arg6[%23, %c0_9] : memref<24x128xf32, #tpu.memory_space<vmem>>, vector<1x128xf32>
      tpu.vector_store %arg6[%23, %c0_9], %21 {strides = array<i32>} : memref<24x128xf32, #tpu.memory_space<vmem>>, vector<1x128xf32>,
      %c1_i32_10 = arith.constant 1 : i32
      %25 = arith.index_cast %c1_i32_10 : i32 to index
      %c0_11 = arith.constant 0 : index
      %26 = vector.load %arg2[%25, %c0_11] : memref<8x128xf32, #tpu.memory_space<vmem>>, vector<1x128xf32>
      %c8_i32_12 = arith.constant 8 : i32
      %27 = arith.addi %c1_i32_10, %c8_i32_12 : i32
      %c1_i32_13 = arith.constant 1 : i32
      %28 = arith.addi %27, %c1_i32_13 : i32
      %29 = arith.index_cast %28 : i32 to index
      %c0_14 = arith.constant 0 : index
      %30 = vector.load %arg6[%29, %c0_14] : memref<24x128xf32, #tpu.memory_space<vmem>>, vector<1x128xf32>
      %31 = arith.index_cast %c1_i32_10 : i32 to index
      %c0_15 = arith.constant 0 : index
      %32 = vector.load %arg4[%31, %c0_15] : memref<8x128xf32, #tpu.memory_space<vmem>>, vector<1x128xf32>
      %33 = arith.addf %21, %30 : vector<1x128xf32>
      %34 = arith.mulf %26, %33 : vector<1x128xf32>
      %35 = arith.cmpf olt, %32, %34 : vector<1x128xf32>
      %36 = arith.select %35, %26, %3 : vector<1x128xi1>, vector<1x128xf32>
      %c8_i32_16 = arith.constant 8 : i32
      %37 = arith.addi %c1_i32_10, %c8_i32_16 : i32
      %38 = arith.index_cast %37 : i32 to index
      %c0_17 = arith.constant 0 : index
      %39 = vector.load %arg6[%38, %c0_17] : memref<24x128xf32, #tpu.memory_space<vmem>>, vector<1x128xf32>
      tpu.vector_store %arg6[%38, %c0_17], %36 {strides = array<i32>} : memref<24x128xf32, #tpu.memory_space<vmem>>, vector<1x128xf32>,
      %c2_i32 = arith.constant 2 : i32
      %40 = arith.index_cast %c2_i32 : i32 to index
      %c0_18 = arith.constant 0 : index
      %41 = vector.load %arg2[%40, %c0_18] : memref<8x128xf32, #tpu.memory_space<vmem>>, vector<1x128xf32>
      %c8_i32_19 = arith.constant 8 : i32
      %42 = arith.addi %c2_i32, %c8_i32_19 : i32
      %c1_i32_20 = arith.constant 1 : i32
      %43 = arith.addi %42, %c1_i32_20 : i32
      %44 = arith.index_cast %43 : i32 to index
      %c0_21 = arith.constant 0 : index
      %45 = vector.load %arg6[%44, %c0_21] : memref<24x128xf32, #tpu.memory_space<vmem>>, vector<1x128xf32>
      %46 = arith.index_cast %c2_i32 : i32 to index
      %c0_22 = arith.constant 0 : index
      %47 = vector.load %arg4[%46, %c0_22] : memref<8x128xf32, #tpu.memory_space<vmem>>, vector<1x128xf32>
      %48 = arith.addf %36, %45 : vector<1x128xf32>
      %49 = arith.mulf %41, %48 : vector<1x128xf32>
      %50 = arith.cmpf olt, %47, %49 : vector<1x128xf32>
      %51 = arith.select %50, %41, %3 : vector<1x128xi1>, vector<1x128xf32>
      %c8_i32_23 = arith.constant 8 : i32
      %52 = arith.addi %c2_i32, %c8_i32_23 : i32
      %53 = arith.index_cast %52 : i32 to index
      %c0_24 = arith.constant 0 : index
      %54 = vector.load %arg6[%53, %c0_24] : memref<24x128xf32, #tpu.memory_space<vmem>>, vector<1x128xf32>
      tpu.vector_store %arg6[%53, %c0_24], %51 {strides = array<i32>} : memref<24x128xf32, #tpu.memory_space<vmem>>, vector<1x128xf32>,
      %c3_i32 = arith.constant 3 : i32
      %55 = arith.index_cast %c3_i32 : i32 to index
      %c0_25 = arith.constant 0 : index
      %56 = vector.load %arg2[%55, %c0_25] : memref<8x128xf32, #tpu.memory_space<vmem>>, vector<1x128xf32>
      %c8_i32_26 = arith.constant 8 : i32
      %57 = arith.addi %c3_i32, %c8_i32_26 : i32
      %c1_i32_27 = arith.constant 1 : i32
      %58 = arith.addi %57, %c1_i32_27 : i32
      %59 = arith.index_cast %58 : i32 to index
      %c0_28 = arith.constant 0 : index
      %60 = vector.load %arg6[%59, %c0_28] : memref<24x128xf32, #tpu.memory_space<vmem>>, vector<1x128xf32>
      %61 = arith.index_cast %c3_i32 : i32 to index
      %c0_29 = arith.constant 0 : index
      %62 = vector.load %arg4[%61, %c0_29] : memref<8x128xf32, #tpu.memory_space<vmem>>, vector<1x128xf32>
      %63 = arith.addf %51, %60 : vector<1x128xf32>
      %64 = arith.mulf %56, %63 : vector<1x128xf32>
      %65 = arith.cmpf olt, %62, %64 : vector<1x128xf32>
      %66 = arith.select %65, %56, %3 : vector<1x128xi1>, vector<1x128xf32>
      %c8_i32_30 = arith.constant 8 : i32
      %67 = arith.addi %c3_i32, %c8_i32_30 : i32
      %68 = arith.index_cast %67 : i32 to index
      %c0_31 = arith.constant 0 : index
      %69 = vector.load %arg6[%68, %c0_31] : memref<24x128xf32, #tpu.memory_space<vmem>>, vector<1x128xf32>
      tpu.vector_store %arg6[%68, %c0_31], %66 {strides = array<i32>} : memref<24x128xf32, #tpu.memory_space<vmem>>, vector<1x128xf32>,
      %c4_i32 = arith.constant 4 : i32
      %70 = arith.index_cast %c4_i32 : i32 to index
      %c0_32 = arith.constant 0 : index
      %71 = vector.load %arg2[%70, %c0_32] : memref<8x128xf32, #tpu.memory_space<vmem>>, vector<1x128xf32>
      %c8_i32_33 = arith.constant 8 : i32
      %72 = arith.addi %c4_i32, %c8_i32_33 : i32
      %c1_i32_34 = arith.constant 1 : i32
      %73 = arith.addi %72, %c1_i32_34 : i32
      %74 = arith.index_cast %73 : i32 to index
      %c0_35 = arith.constant 0 : index
      %75 = vector.load %arg6[%74, %c0_35] : memref<24x128xf32, #tpu.memory_space<vmem>>, vector<1x128xf32>
      %76 = arith.index_cast %c4_i32 : i32 to index
      %c0_36 = arith.constant 0 : index
      %77 = vector.load %arg4[%76, %c0_36] : memref<8x128xf32, #tpu.memory_space<vmem>>, vector<1x128xf32>
      %78 = arith.addf %66, %75 : vector<1x128xf32>
      %79 = arith.mulf %71, %78 : vector<1x128xf32>
      %80 = arith.cmpf olt, %77, %79 : vector<1x128xf32>
      %81 = arith.select %80, %71, %3 : vector<1x128xi1>, vector<1x128xf32>
      %c8_i32_37 = arith.constant 8 : i32
      %82 = arith.addi %c4_i32, %c8_i32_37 : i32
      %83 = arith.index_cast %82 : i32 to index
      %c0_38 = arith.constant 0 : index
      %84 = vector.load %arg6[%83, %c0_38] : memref<24x128xf32, #tpu.memory_space<vmem>>, vector<1x128xf32>
      tpu.vector_store %arg6[%83, %c0_38], %81 {strides = array<i32>} : memref<24x128xf32, #tpu.memory_space<vmem>>, vector<1x128xf32>,
      %c5_i32 = arith.constant 5 : i32
      %85 = arith.index_cast %c5_i32 : i32 to index
      %c0_39 = arith.constant 0 : index
      %86 = vector.load %arg2[%85, %c0_39] : memref<8x128xf32, #tpu.memory_space<vmem>>, vector<1x128xf32>
      %c8_i32_40 = arith.constant 8 : i32
      %87 = arith.addi %c5_i32, %c8_i32_40 : i32
      %c1_i32_41 = arith.constant 1 : i32
      %88 = arith.addi %87, %c1_i32_41 : i32
      %89 = arith.index_cast %88 : i32 to index
      %c0_42 = arith.constant 0 : index
      %90 = vector.load %arg6[%89, %c0_42] : memref<24x128xf32, #tpu.memory_space<vmem>>, vector<1x128xf32>
      %91 = arith.index_cast %c5_i32 : i32 to index
      %c0_43 = arith.constant 0 : index
      %92 = vector.load %arg4[%91, %c0_43] : memref<8x128xf32, #tpu.memory_space<vmem>>, vector<1x128xf32>
      %93 = arith.addf %81, %90 : vector<1x128xf32>
      %94 = arith.mulf %86, %93 : vector<1x128xf32>
      %95 = arith.cmpf olt, %92, %94 : vector<1x128xf32>
      %96 = arith.select %95, %86, %3 : vector<1x128xi1>, vector<1x128xf32>
      %c8_i32_44 = arith.constant 8 : i32
      %97 = arith.addi %c5_i32, %c8_i32_44 : i32
      %98 = arith.index_cast %97 : i32 to index
      %c0_45 = arith.constant 0 : index
      %99 = vector.load %arg6[%98, %c0_45] : memref<24x128xf32, #tpu.memory_space<vmem>>, vector<1x128xf32>
      tpu.vector_store %arg6[%98, %c0_45], %96 {strides = array<i32>} : memref<24x128xf32, #tpu.memory_space<vmem>>, vector<1x128xf32>,
      %c6_i32 = arith.constant 6 : i32
      %100 = arith.index_cast %c6_i32 : i32 to index
      %c0_46 = arith.constant 0 : index
      %101 = vector.load %arg2[%100, %c0_46] : memref<8x128xf32, #tpu.memory_space<vmem>>, vector<1x128xf32>
      %c8_i32_47 = arith.constant 8 : i32
      %102 = arith.addi %c6_i32, %c8_i32_47 : i32
      %c1_i32_48 = arith.constant 1 : i32
      %103 = arith.addi %102, %c1_i32_48 : i32
      %104 = arith.index_cast %103 : i32 to index
      %c0_49 = arith.constant 0 : index
      %105 = vector.load %arg6[%104, %c0_49] : memref<24x128xf32, #tpu.memory_space<vmem>>, vector<1x128xf32>
      %106 = arith.index_cast %c6_i32 : i32 to index
      %c0_50 = arith.constant 0 : index
      %107 = vector.load %arg4[%106, %c0_50] : memref<8x128xf32, #tpu.memory_space<vmem>>, vector<1x128xf32>
      %108 = arith.addf %96, %105 : vector<1x128xf32>
      %109 = arith.mulf %101, %108 : vector<1x128xf32>
      %110 = arith.cmpf olt, %107, %109 : vector<1x128xf32>
      %111 = arith.select %110, %101, %3 : vector<1x128xi1>, vector<1x128xf32>
      %c8_i32_51 = arith.constant 8 : i32
      %112 = arith.addi %c6_i32, %c8_i32_51 : i32
      %113 = arith.index_cast %112 : i32 to index
      %c0_52 = arith.constant 0 : index
      %114 = vector.load %arg6[%113, %c0_52] : memref<24x128xf32, #tpu.memory_space<vmem>>, vector<1x128xf32>
      tpu.vector_store %arg6[%113, %c0_52], %111 {strides = array<i32>} : memref<24x128xf32, #tpu.memory_space<vmem>>, vector<1x128xf32>,
      %c7_i32 = arith.constant 7 : i32
      %115 = arith.index_cast %c7_i32 : i32 to index
      %c0_53 = arith.constant 0 : index
      %116 = vector.load %arg2[%115, %c0_53] : memref<8x128xf32, #tpu.memory_space<vmem>>, vector<1x128xf32>
      %c8_i32_54 = arith.constant 8 : i32
      %117 = arith.addi %c7_i32, %c8_i32_54 : i32
      %c1_i32_55 = arith.constant 1 : i32
      %118 = arith.addi %117, %c1_i32_55 : i32
      %119 = arith.index_cast %118 : i32 to index
      %c0_56 = arith.constant 0 : index
      %120 = vector.load %arg6[%119, %c0_56] : memref<24x128xf32, #tpu.memory_space<vmem>>, vector<1x128xf32>
      %121 = arith.index_cast %c7_i32 : i32 to index
      %c0_57 = arith.constant 0 : index
      %122 = vector.load %arg4[%121, %c0_57] : memref<8x128xf32, #tpu.memory_space<vmem>>, vector<1x128xf32>
      %123 = arith.addf %111, %120 : vector<1x128xf32>
      %124 = arith.mulf %116, %123 : vector<1x128xf32>
      %125 = arith.cmpf olt, %122, %124 : vector<1x128xf32>
      %126 = arith.select %125, %116, %3 : vector<1x128xi1>, vector<1x128xf32>
      %c8_i32_58 = arith.constant 8 : i32
      %127 = arith.addi %c7_i32, %c8_i32_58 : i32
      %128 = arith.index_cast %127 : i32 to index
      %c0_59 = arith.constant 0 : index
      %129 = vector.load %arg6[%128, %c0_59] : memref<24x128xf32, #tpu.memory_space<vmem>>, vector<1x128xf32>
      tpu.vector_store %arg6[%128, %c0_59], %126 {strides = array<i32>} : memref<24x128xf32, #tpu.memory_space<vmem>>, vector<1x128xf32>,
      %c8_i32_60 = arith.constant 8 : i32
    } else {
    }
    %c0_i32_3 = arith.constant 0 : i32
    %7 = arith.cmpi eq, %arg1, %c0_i32_3 : i32
    %8 = arith.extui %7 : i1 to i32
    %c0_i32_4 = arith.constant 0 : i32
    %9 = arith.cmpi ne, %8, %c0_i32_4 : i32
    scf.if %9 {
      %c0_i32_5 = arith.constant 0 : i32
      %10 = arith.index_cast %c0_i32_5 : i32 to index
      %c0 = arith.constant 0 : index
      %11 = vector.load %arg2[%10, %c0] : memref<8x128xf32, #tpu.memory_space<vmem>>, vector<1x128xf32>
      %c8_i32 = arith.constant 8 : i32
      %12 = arith.addi %c0_i32_5, %c8_i32 : i32
      %c1_i32 = arith.constant 1 : i32
      %13 = arith.addi %12, %c1_i32 : i32
      %14 = arith.index_cast %13 : i32 to index
      %c0_6 = arith.constant 0 : index
      %15 = vector.load %arg6[%14, %c0_6] : memref<24x128xf32, #tpu.memory_space<vmem>>, vector<1x128xf32>
      %16 = arith.index_cast %c0_i32_5 : i32 to index
      %c0_7 = arith.constant 0 : index
      %17 = vector.load %arg4[%16, %c0_7] : memref<8x128xf32, #tpu.memory_space<vmem>>, vector<1x128xf32>
      %18 = arith.addf %3, %15 : vector<1x128xf32>
      %19 = arith.mulf %11, %18 : vector<1x128xf32>
      %20 = arith.cmpf olt, %17, %19 : vector<1x128xf32>
      %21 = arith.select %20, %11, %3 : vector<1x128xi1>, vector<1x128xf32>
      %22 = arith.extui %20 : vector<1x128xi1> to vector<1x128xi32>
      %23 = arith.index_cast %c0_i32_5 : i32 to index
      %c0_8 = arith.constant 0 : index
      %24 = vector.load %arg5[%23, %c0_8] : memref<8x128xi32, #tpu.memory_space<vmem>>, vector<1x128xi32>
      tpu.vector_store %arg5[%23, %c0_8], %22 {strides = array<i32>} : memref<8x128xi32, #tpu.memory_space<vmem>>, vector<1x128xi32>,
      %c1_i32_9 = arith.constant 1 : i32
      %25 = arith.index_cast %c1_i32_9 : i32 to index
      %c0_10 = arith.constant 0 : index
      %26 = vector.load %arg2[%25, %c0_10] : memref<8x128xf32, #tpu.memory_space<vmem>>, vector<1x128xf32>
      %c8_i32_11 = arith.constant 8 : i32
      %27 = arith.addi %c1_i32_9, %c8_i32_11 : i32
      %c1_i32_12 = arith.constant 1 : i32
      %28 = arith.addi %27, %c1_i32_12 : i32
      %29 = arith.index_cast %28 : i32 to index
      %c0_13 = arith.constant 0 : index
      %30 = vector.load %arg6[%29, %c0_13] : memref<24x128xf32, #tpu.memory_space<vmem>>, vector<1x128xf32>
      %31 = arith.index_cast %c1_i32_9 : i32 to index
      %c0_14 = arith.constant 0 : index
      %32 = vector.load %arg4[%31, %c0_14] : memref<8x128xf32, #tpu.memory_space<vmem>>, vector<1x128xf32>
      %33 = arith.addf %21, %30 : vector<1x128xf32>
      %34 = arith.mulf %26, %33 : vector<1x128xf32>
      %35 = arith.cmpf olt, %32, %34 : vector<1x128xf32>
      %36 = arith.select %35, %26, %3 : vector<1x128xi1>, vector<1x128xf32>
      %37 = arith.extui %35 : vector<1x128xi1> to vector<1x128xi32>
      %38 = arith.index_cast %c1_i32_9 : i32 to index
      %c0_15 = arith.constant 0 : index
      %39 = vector.load %arg5[%38, %c0_15] : memref<8x128xi32, #tpu.memory_space<vmem>>, vector<1x128xi32>
      tpu.vector_store %arg5[%38, %c0_15], %37 {strides = array<i32>} : memref<8x128xi32, #tpu.memory_space<vmem>>, vector<1x128xi32>,
      %c2_i32 = arith.constant 2 : i32
      %40 = arith.index_cast %c2_i32 : i32 to index
      %c0_16 = arith.constant 0 : index
      %41 = vector.load %arg2[%40, %c0_16] : memref<8x128xf32, #tpu.memory_space<vmem>>, vector<1x128xf32>
      %c8_i32_17 = arith.constant 8 : i32
      %42 = arith.addi %c2_i32, %c8_i32_17 : i32
      %c1_i32_18 = arith.constant 1 : i32
      %43 = arith.addi %42, %c1_i32_18 : i32
      %44 = arith.index_cast %43 : i32 to index
      %c0_19 = arith.constant 0 : index
      %45 = vector.load %arg6[%44, %c0_19] : memref<24x128xf32, #tpu.memory_space<vmem>>, vector<1x128xf32>
      %46 = arith.index_cast %c2_i32 : i32 to index
      %c0_20 = arith.constant 0 : index
      %47 = vector.load %arg4[%46, %c0_20] : memref<8x128xf32, #tpu.memory_space<vmem>>, vector<1x128xf32>
      %48 = arith.addf %36, %45 : vector<1x128xf32>
      %49 = arith.mulf %41, %48 : vector<1x128xf32>
      %50 = arith.cmpf olt, %47, %49 : vector<1x128xf32>
      %51 = arith.select %50, %41, %3 : vector<1x128xi1>, vector<1x128xf32>
      %52 = arith.extui %50 : vector<1x128xi1> to vector<1x128xi32>
      %53 = arith.index_cast %c2_i32 : i32 to index
      %c0_21 = arith.constant 0 : index
      %54 = vector.load %arg5[%53, %c0_21] : memref<8x128xi32, #tpu.memory_space<vmem>>, vector<1x128xi32>
      tpu.vector_store %arg5[%53, %c0_21], %52 {strides = array<i32>} : memref<8x128xi32, #tpu.memory_space<vmem>>, vector<1x128xi32>,
      %c3_i32 = arith.constant 3 : i32
      %55 = arith.index_cast %c3_i32 : i32 to index
      %c0_22 = arith.constant 0 : index
      %56 = vector.load %arg2[%55, %c0_22] : memref<8x128xf32, #tpu.memory_space<vmem>>, vector<1x128xf32>
      %c8_i32_23 = arith.constant 8 : i32
      %57 = arith.addi %c3_i32, %c8_i32_23 : i32
      %c1_i32_24 = arith.constant 1 : i32
      %58 = arith.addi %57, %c1_i32_24 : i32
      %59 = arith.index_cast %58 : i32 to index
      %c0_25 = arith.constant 0 : index
      %60 = vector.load %arg6[%59, %c0_25] : memref<24x128xf32, #tpu.memory_space<vmem>>, vector<1x128xf32>
      %61 = arith.index_cast %c3_i32 : i32 to index
      %c0_26 = arith.constant 0 : index
      %62 = vector.load %arg4[%61, %c0_26] : memref<8x128xf32, #tpu.memory_space<vmem>>, vector<1x128xf32>
      %63 = arith.addf %51, %60 : vector<1x128xf32>
      %64 = arith.mulf %56, %63 : vector<1x128xf32>
      %65 = arith.cmpf olt, %62, %64 : vector<1x128xf32>
      %66 = arith.select %65, %56, %3 : vector<1x128xi1>, vector<1x128xf32>
      %67 = arith.extui %65 : vector<1x128xi1> to vector<1x128xi32>
      %68 = arith.index_cast %c3_i32 : i32 to index
      %c0_27 = arith.constant 0 : index
      %69 = vector.load %arg5[%68, %c0_27] : memref<8x128xi32, #tpu.memory_space<vmem>>, vector<1x128xi32>
      tpu.vector_store %arg5[%68, %c0_27], %67 {strides = array<i32>} : memref<8x128xi32, #tpu.memory_space<vmem>>, vector<1x128xi32>,
      %c4_i32 = arith.constant 4 : i32
      %70 = arith.index_cast %c4_i32 : i32 to index
      %c0_28 = arith.constant 0 : index
      %71 = vector.load %arg2[%70, %c0_28] : memref<8x128xf32, #tpu.memory_space<vmem>>, vector<1x128xf32>
      %c8_i32_29 = arith.constant 8 : i32
      %72 = arith.addi %c4_i32, %c8_i32_29 : i32
      %c1_i32_30 = arith.constant 1 : i32
      %73 = arith.addi %72, %c1_i32_30 : i32
      %74 = arith.index_cast %73 : i32 to index
      %c0_31 = arith.constant 0 : index
      %75 = vector.load %arg6[%74, %c0_31] : memref<24x128xf32, #tpu.memory_space<vmem>>, vector<1x128xf32>
      %76 = arith.index_cast %c4_i32 : i32 to index
      %c0_32 = arith.constant 0 : index
      %77 = vector.load %arg4[%76, %c0_32] : memref<8x128xf32, #tpu.memory_space<vmem>>, vector<1x128xf32>
      %78 = arith.addf %66, %75 : vector<1x128xf32>
      %79 = arith.mulf %71, %78 : vector<1x128xf32>
      %80 = arith.cmpf olt, %77, %79 : vector<1x128xf32>
      %81 = arith.select %80, %71, %3 : vector<1x128xi1>, vector<1x128xf32>
      %82 = arith.extui %80 : vector<1x128xi1> to vector<1x128xi32>
      %83 = arith.index_cast %c4_i32 : i32 to index
      %c0_33 = arith.constant 0 : index
      %84 = vector.load %arg5[%83, %c0_33] : memref<8x128xi32, #tpu.memory_space<vmem>>, vector<1x128xi32>
      tpu.vector_store %arg5[%83, %c0_33], %82 {strides = array<i32>} : memref<8x128xi32, #tpu.memory_space<vmem>>, vector<1x128xi32>,
      %c5_i32 = arith.constant 5 : i32
      %85 = arith.index_cast %c5_i32 : i32 to index
      %c0_34 = arith.constant 0 : index
      %86 = vector.load %arg2[%85, %c0_34] : memref<8x128xf32, #tpu.memory_space<vmem>>, vector<1x128xf32>
      %c8_i32_35 = arith.constant 8 : i32
      %87 = arith.addi %c5_i32, %c8_i32_35 : i32
      %c1_i32_36 = arith.constant 1 : i32
      %88 = arith.addi %87, %c1_i32_36 : i32
      %89 = arith.index_cast %88 : i32 to index
      %c0_37 = arith.constant 0 : index
      %90 = vector.load %arg6[%89, %c0_37] : memref<24x128xf32, #tpu.memory_space<vmem>>, vector<1x128xf32>
      %91 = arith.index_cast %c5_i32 : i32 to index
      %c0_38 = arith.constant 0 : index
      %92 = vector.load %arg4[%91, %c0_38] : memref<8x128xf32, #tpu.memory_space<vmem>>, vector<1x128xf32>
      %93 = arith.addf %81, %90 : vector<1x128xf32>
      %94 = arith.mulf %86, %93 : vector<1x128xf32>
      %95 = arith.cmpf olt, %92, %94 : vector<1x128xf32>
      %96 = arith.select %95, %86, %3 : vector<1x128xi1>, vector<1x128xf32>
      %97 = arith.extui %95 : vector<1x128xi1> to vector<1x128xi32>
      %98 = arith.index_cast %c5_i32 : i32 to index
      %c0_39 = arith.constant 0 : index
      %99 = vector.load %arg5[%98, %c0_39] : memref<8x128xi32, #tpu.memory_space<vmem>>, vector<1x128xi32>
      tpu.vector_store %arg5[%98, %c0_39], %97 {strides = array<i32>} : memref<8x128xi32, #tpu.memory_space<vmem>>, vector<1x128xi32>,
      %c6_i32 = arith.constant 6 : i32
      %100 = arith.index_cast %c6_i32 : i32 to index
      %c0_40 = arith.constant 0 : index
      %101 = vector.load %arg2[%100, %c0_40] : memref<8x128xf32, #tpu.memory_space<vmem>>, vector<1x128xf32>
      %c8_i32_41 = arith.constant 8 : i32
      %102 = arith.addi %c6_i32, %c8_i32_41 : i32
      %c1_i32_42 = arith.constant 1 : i32
      %103 = arith.addi %102, %c1_i32_42 : i32
      %104 = arith.index_cast %103 : i32 to index
      %c0_43 = arith.constant 0 : index
      %105 = vector.load %arg6[%104, %c0_43] : memref<24x128xf32, #tpu.memory_space<vmem>>, vector<1x128xf32>
      %106 = arith.index_cast %c6_i32 : i32 to index
      %c0_44 = arith.constant 0 : index
      %107 = vector.load %arg4[%106, %c0_44] : memref<8x128xf32, #tpu.memory_space<vmem>>, vector<1x128xf32>
      %108 = arith.addf %96, %105 : vector<1x128xf32>
      %109 = arith.mulf %101, %108 : vector<1x128xf32>
      %110 = arith.cmpf olt, %107, %109 : vector<1x128xf32>
      %111 = arith.select %110, %101, %3 : vector<1x128xi1>, vector<1x128xf32>
      %112 = arith.extui %110 : vector<1x128xi1> to vector<1x128xi32>
      %113 = arith.index_cast %c6_i32 : i32 to index
      %c0_45 = arith.constant 0 : index
      %114 = vector.load %arg5[%113, %c0_45] : memref<8x128xi32, #tpu.memory_space<vmem>>, vector<1x128xi32>
      tpu.vector_store %arg5[%113, %c0_45], %112 {strides = array<i32>} : memref<8x128xi32, #tpu.memory_space<vmem>>, vector<1x128xi32>,
      %c7_i32 = arith.constant 7 : i32
      %115 = arith.index_cast %c7_i32 : i32 to index
      %c0_46 = arith.constant 0 : index
      %116 = vector.load %arg2[%115, %c0_46] : memref<8x128xf32, #tpu.memory_space<vmem>>, vector<1x128xf32>
      %c8_i32_47 = arith.constant 8 : i32
      %117 = arith.addi %c7_i32, %c8_i32_47 : i32
      %c1_i32_48 = arith.constant 1 : i32
      %118 = arith.addi %117, %c1_i32_48 : i32
      %119 = arith.index_cast %118 : i32 to index
      %c0_49 = arith.constant 0 : index
      %120 = vector.load %arg6[%119, %c0_49] : memref<24x128xf32, #tpu.memory_space<vmem>>, vector<1x128xf32>
      %121 = arith.index_cast %c7_i32 : i32 to index
      %c0_50 = arith.constant 0 : index
      %122 = vector.load %arg4[%121, %c0_50] : memref<8x128xf32, #tpu.memory_space<vmem>>, vector<1x128xf32>
      %123 = arith.addf %111, %120 : vector<1x128xf32>
      %124 = arith.mulf %116, %123 : vector<1x128xf32>
      %125 = arith.cmpf olt, %122, %124 : vector<1x128xf32>
      %126 = arith.select %125, %116, %3 : vector<1x128xi1>, vector<1x128xf32>
      %127 = arith.extui %125 : vector<1x128xi1> to vector<1x128xi32>
      %128 = arith.index_cast %c7_i32 : i32 to index
      %c0_51 = arith.constant 0 : index
      %129 = vector.load %arg5[%128, %c0_51] : memref<8x128xi32, #tpu.memory_space<vmem>>, vector<1x128xi32>
      tpu.vector_store %arg5[%128, %c0_51], %127 {strides = array<i32>} : memref<8x128xi32, #tpu.memory_space<vmem>>, vector<1x128xi32>,
      %c8_i32_52 = arith.constant 8 : i32
    } else {
    }
    return
  }
  func.func @transform_0(%arg0: i32, %arg1: i32) -> (i32, i32) {
    %c0_i32 = arith.constant 0 : i32
    %c0_i32_0 = arith.constant 0 : i32
    return %c0_i32, %arg0 : i32, i32
  }
  func.func @transform_1(%arg0: i32, %arg1: i32) -> (i32, i32) {
    %c0_i32 = arith.constant 0 : i32
    %c0_i32_0 = arith.constant 0 : i32
    return %c0_i32, %arg0 : i32, i32
  }
  func.func @transform_2(%arg0: i32, %arg1: i32) -> (i32, i32) {
    %c0_i32 = arith.constant 0 : i32
    return %arg1, %arg0 : i32, i32
  }
  func.func @transform_3(%arg0: i32, %arg1: i32) -> (i32, i32) {
    %c0_i32 = arith.constant 0 : i32
    %c0_i32_0 = arith.constant 0 : i32
    return %c0_i32, %arg0 : i32, i32
  }
}

</mosaic_0001>

<llo_original>
// kernel: tpu_custom_call.1
$region0: #{tpu_custom_call.1}
  #allocation0 [shape = 'u32[]', space=smem, size = 0x4, offset = 0x4, fixed_abs, tag = 'smem constant byte address 0x4 - core index']
  #allocation1 [shape = 'u32[144,128]{1,0:T(1,128)}', space=vmem, size = 0x12000, scoped, tag = 'internal scratch']
  #allocation2 [shape = 'f32[24,128]{1,0:T(8,128)}', space=vmem, size = 0x3000, scoped, tag = 'scratch operand']
  %s0 = inlined_call_operand.hbm [shape: f32[8,128], index: 0, kind: input, shape index: {}]
  %s1 = inlined_call_operand.hbm [shape: f32[8,128], index: 1, kind: input, shape index: {}]
  %s2 = inlined_call_operand.hbm [shape: f32[8,128], index: 2, kind: input, shape index: {}]
  %s3 = inlined_call_operand.hbm [shape: s32[8,128], index: 3, kind: output, shape index: {}]
  %s4 = sld [smem:[#allocation0]]
  $region46: #{tpu_custom_call.1} parent=0
    _
  %s6 = ssub.s32 1, %s4
  %s7 = scalar_select 0, %s6, %s4
  $region1: #{tpu_custom_call.1} parent=0
    #allocation3 [shape = 'u8[4096]{0}', space=vmem, size = 0x1000, scoped, tag = 'input window, operand 0, single buffered']
    #allocation4 [shape = 's32[1]{0}', space=sflag, size = 0x4, scoped, tag = 'scoped memory for tpu_custom_call.1']
    #allocation5 [shape = 's32[1]{0}', space=sflag, size = 0x4, scoped, tag = 'scoped memory for tpu_custom_call.1']
    #allocation6 [shape = 'u8[4096]{0}', space=vmem, size = 0x1000, scoped, tag = 'input window, operand 1, single buffered']
    #allocation7 [shape = 's32[1]{0}', space=sflag, size = 0x4, scoped, tag = 'scoped memory for tpu_custom_call.1']
    #allocation8 [shape = 'u8[4096]{0}', space=vmem, size = 0x1000, scoped, tag = 'input window, operand 2, single buffered']
    #allocation9 [shape = 'u8[4096]{0}', space=vmem, size = 0x1000, scoped, tag = 'output window, operand 0, single buffered']
    %8 = vsyncpa [#allocation4], 0
    %9 = vsyncpa [#allocation7], 0
    %10 = vsyncpa [#allocation5], 0
    // Predicated region
    $region2: #{tpu_custom_call.1} parent=1 // pred_check
      _
    $region3: #{tpu_custom_call.1} parent=1 // pred_check_branch
      %12 = sbr.rel (0) target = $region5
    $region4: #{tpu_custom_call.1} parent=1 // pred_region
      %s14 = ssub.s32 128, 128
      %15 = vsyncadd [#allocation4], %s14
      %s17 = sshll.u32 [#allocation3], 4
      %s18 = int_to_ptr.vmem [resolvable:$true] %s17
      %20 = dma.hbm_to_vmem [thread:$0]  %s0, 128, %s18, [#allocation4]
    $region5: #{tpu_custom_call.1} parent=1 // pred_fallthru
      _
    // Predicated region
    $region6: #{tpu_custom_call.1} parent=1 // pred_check
      _
    $region7: #{tpu_custom_call.1} parent=1 // pred_check_branch
      %22 = sbr.rel (0) target = $region9
    $region8: #{tpu_custom_call.1} parent=1 // pred_region
      %s24 = ssub.s32 128, 128
      %25 = vsyncadd [#allocation7], %s24
      %s27 = sshll.u32 [#allocation6], 4
      %s28 = int_to_ptr.vmem [resolvable:$true] %s27
      %30 = dma.hbm_to_vmem [thread:$0]  %s1, 128, %s28, [#allocation7]
    $region9: #{tpu_custom_call.1} parent=1 // pred_fallthru
      _
    // Predicated region
    $region10: #{tpu_custom_call.1} parent=1 // pred_check
      _
    $region11: #{tpu_custom_call.1} parent=1 // pred_check_branch
      %32 = sbr.rel (0) target = $region13
    $region12: #{tpu_custom_call.1} parent=1 // pred_region
      %s34 = ssub.s32 128, 128
      %35 = vsyncadd [#allocation7], %s34
      %s37 = sshll.u32 [#allocation8], 4
      %s38 = int_to_ptr.vmem [resolvable:$true] %s37
      %40 = dma.hbm_to_vmem [thread:$0]  %s2, 128, %s38, [#allocation7]
    $region13: #{tpu_custom_call.1} parent=1 // pred_fallthru
      _
    // Predicated region
    $region14: #{tpu_custom_call.1} parent=1 // pred_check
      _
    $region15: #{tpu_custom_call.1} parent=1 // pred_check_branch
      %42 = sbr.rel (0) target = $region17
    $region16: #{tpu_custom_call.1} parent=1 // pred_region
      %43 = dma.done [#allocation4], 128
    $region17: #{tpu_custom_call.1} parent=1 // pred_fallthru
      _
    // Predicated region
    $region18: #{tpu_custom_call.1} parent=1 // pred_check
      _
    $region19: #{tpu_custom_call.1} parent=1 // pred_check_branch
      %45 = sbr.rel (0) target = $region21
    $region20: #{tpu_custom_call.1} parent=1 // pred_region
      %46 = dma.done [#allocation7], 128
    $region21: #{tpu_custom_call.1} parent=1 // pred_fallthru
      _
    // Predicated region
    $region22: #{tpu_custom_call.1} parent=1 // pred_check
      _
    $region23: #{tpu_custom_call.1} parent=1 // pred_check_branch
      %48 = sbr.rel (0) target = $region25
    $region24: #{tpu_custom_call.1} parent=1 // pred_region
      %49 = dma.done [#allocation7], 128
    $region25: #{tpu_custom_call.1} parent=1 // pred_fallthru
      _
    %p50 = scmp.eq.s32.totalorder 0, 0
    // Predicated region
    $region26: #{tpu_custom_call.1} parent=1 // pred_check
      %p51 = pneg %p50
    $region27: #{tpu_custom_call.1} parent=1 // pred_check_branch
      %53 = sbr.rel (%p51) target = $region29
    $region28: #{tpu_custom_call.1} parent=1 // pred_region
      %54 = vst [vmem:[#allocation2] sm:$0xff] 0.0
      %55 = vst [vmem:[#allocation2 + $0x8] sm:$0xff] 0.0
      %56 = vst [vmem:[#allocation2 + $0x10] sm:$0xff] 0.0
      %v57 = vld [vmem:[#allocation6] sm:$0xff]
      %v58 = vld [vmem:[#allocation3] sm:$0xff]
      %v59 = vmul.f32 %v57, %v58
      %60 = vst [vmem:[#allocation2 + $0x8] sm:$0xff] %v59
    $region29: #{tpu_custom_call.1} parent=1 // pred_fallthru
      _
    %p61 = scmp.lt.s32.totalorder 0, 0
    // Predicated region
    $region30: #{tpu_custom_call.1} parent=1 // pred_check
      %p62 = pneg %p61
    $region31: #{tpu_custom_call.1} parent=1 // pred_check_branch
      %64 = sbr.rel (%p62) target = $region33
    $region32: #{tpu_custom_call.1} parent=1 // pred_region
      %v65 = vld [vmem:[#allocation3] sm:$0x1]
      %v66 = vld [vmem:[#allocation2 + $0x9] sm:$0x1]
      %v67 = vld [vmem:[#allocation8] sm:$0x1]
      %v68 = vadd.f32 %v66, 0.0
      %v69 = vmul.f32 %v65, %v68
      %vm70 = vcmp.lt.f32.partialorder %v67, %v69
      %v71 = vsel %vm70, %v65, 0.0
      %72 = vst [vmem:[#allocation2 + $0x8] sm:$0x1] %v71
      %v73 = vld [vmem:[#allocation3 + $0x1] sm:$0x1]
      %v74 = vld [vmem:[#allocation2 + $0xa] sm:$0x1]
      %v75 = vld [vmem:[#allocation8 + $0x1] sm:$0x1]
      %v76 = vadd.f32 %v71, %v74
      %v77 = vmul.f32 %v73, %v76
      %vm78 = vcmp.lt.f32.partialorder %v75, %v77
      %v79 = vsel %vm78, %v73, 0.0
      %80 = vst [vmem:[#allocation2 + $0x9] sm:$0x1] %v79
      %v81 = vld [vmem:[#allocation3 + $0x2] sm:$0x1]
      %v82 = vld [vmem:[#allocation2 + $0xb] sm:$0x1]
      %v83 = vld [vmem:[#allocation8 + $0x2] sm:$0x1]
      %v84 = vadd.f32 %v79, %v82
      %v85 = vmul.f32 %v81, %v84
      %vm86 = vcmp.lt.f32.partialorder %v83, %v85
      %v87 = vsel %vm86, %v81, 0.0
      %88 = vst [vmem:[#allocation2 + $0xa] sm:$0x1] %v87
      %v89 = vld [vmem:[#allocation3 + $0x3] sm:$0x1]
      %v90 = vld [vmem:[#allocation2 + $0xc] sm:$0x1]
      %v91 = vld [vmem:[#allocation8 + $0x3] sm:$0x1]
      %v92 = vadd.f32 %v87, %v90
      %v93 = vmul.f32 %v89, %v92
      %vm94 = vcmp.lt.f32.partialorder %v91, %v93
      %v95 = vsel %vm94, %v89, 0.0
      %96 = vst [vmem:[#allocation2 + $0xb] sm:$0x1] %v95
      %v97 = vld [vmem:[#allocation3 + $0x4] sm:$0x1]
      %v98 = vld [vmem:[#allocation2 + $0xd] sm:$0x1]
      %v99 = vld [vmem:[#allocation8 + $0x4] sm:$0x1]
      %v100 = vadd.f32 %v95, %v98
      %v101 = vmul.f32 %v97, %v100
      %vm102 = vcmp.lt.f32.partialorder %v99, %v101
      %v103 = vsel %vm102, %v97, 0.0
      %104 = vst [vmem:[#allocation2 + $0xc] sm:$0x1] %v103
      %v105 = vld [vmem:[#allocation3 + $0x5] sm:$0x1]
      %v106 = vld [vmem:[#allocation2 + $0xe] sm:$0x1]
      %v107 = vld [vmem:[#allocation8 + $0x5] sm:$0x1]
      %v108 = vadd.f32 %v103, %v106
      %v109 = vmul.f32 %v105, %v108
      %vm110 = vcmp.lt.f32.partialorder %v107, %v109
      %v111 = vsel %vm110, %v105, 0.0
      %112 = vst [vmem:[#allocation2 + $0xd] sm:$0x1] %v111
      %v113 = vld [vmem:[#allocation3 + $0x6] sm:$0x1]
      %v114 = vld [vmem:[#allocation2 + $0xf] sm:$0x1]
      %v115 = vld [vmem:[#allocation8 + $0x6] sm:$0x1]
      %v116 = vadd.f32 %v111, %v114
      %v117 = vmul.f32 %v113, %v116
      %vm118 = vcmp.lt.f32.partialorder %v115, %v117
      %v119 = vsel %vm118, %v113, 0.0
      %120 = vst [vmem:[#allocation2 + $0xe] sm:$0x1] %v119
      %v121 = vld [vmem:[#allocation3 + $0x7] sm:$0x1]
      %v122 = vld [vmem:[#allocation2 + $0x10] sm:$0x1]
      %v123 = vld [vmem:[#allocation8 + $0x7] sm:$0x1]
      %v124 = vadd.f32 %v119, %v122
      %v125 = vmul.f32 %v121, %v124
      %vm126 = vcmp.lt.f32.partialorder %v123, %v125
      %v127 = vsel %vm126, %v121, 0.0
      %128 = vst [vmem:[#allocation2 + $0xf] sm:$0x1] %v127
    $region33: #{tpu_custom_call.1} parent=1 // pred_fallthru
      _
    // Predicated region
    $region34: #{tpu_custom_call.1} parent=1 // pred_check
      %p129 = pneg %p50
    $region35: #{tpu_custom_call.1} parent=1 // pred_check_branch
      %131 = sbr.rel (%p129) target = $region37
    $region36: #{tpu_custom_call.1} parent=1 // pred_region
      %v132 = vld [vmem:[#allocation3] sm:$0x1]
      %v133 = vld [vmem:[#allocation2 + $0x9] sm:$0x1]
      %v134 = vld [vmem:[#allocation8] sm:$0x1]
      %v135 = vadd.f32 %v133, 0.0
      %v136 = vmul.f32 %v132, %v135
      %vm137 = vcmp.lt.f32.partialorder %v134, %v136
      %v138 = vsel %vm137, %v132, 0.0
      %v139 = vsel %vm137, 1, 0
      %140 = vst [vmem:[#allocation9] sm:$0x1] %v139
      %v141 = vld [vmem:[#allocation3 + $0x1] sm:$0x1]
      %v142 = vld [vmem:[#allocation2 + $0xa] sm:$0x1]
      %v143 = vld [vmem:[#allocation8 + $0x1] sm:$0x1]
      %v144 = vadd.f32 %v138, %v142
      %v145 = vmul.f32 %v141, %v144
      %vm146 = vcmp.lt.f32.partialorder %v143, %v145
      %v147 = vsel %vm146, %v141, 0.0
      %v148 = vsel %vm146, 1, 0
      %149 = vst [vmem:[#allocation9 + $0x1] sm:$0x1] %v148
      %v150 = vld [vmem:[#allocation3 + $0x2] sm:$0x1]
      %v151 = vld [vmem:[#allocation2 + $0xb] sm:$0x1]
      %v152 = vld [vmem:[#allocation8 + $0x2] sm:$0x1]
      %v153 = vadd.f32 %v147, %v151
      %v154 = vmul.f32 %v150, %v153
      %vm155 = vcmp.lt.f32.partialorder %v152, %v154
      %v156 = vsel %vm155, %v150, 0.0
      %v157 = vsel %vm155, 1, 0
      %158 = vst [vmem:[#allocation9 + $0x2] sm:$0x1] %v157
      %v159 = vld [vmem:[#allocation3 + $0x3] sm:$0x1]
      %v160 = vld [vmem:[#allocation2 + $0xc] sm:$0x1]
      %v161 = vld [vmem:[#allocation8 + $0x3] sm:$0x1]
      %v162 = vadd.f32 %v156, %v160
      %v163 = vmul.f32 %v159, %v162
      %vm164 = vcmp.lt.f32.partialorder %v161, %v163
      %v165 = vsel %vm164, %v159, 0.0
      %v166 = vsel %vm164, 1, 0
      %167 = vst [vmem:[#allocation9 + $0x3] sm:$0x1] %v166
      %v168 = vld [vmem:[#allocation3 + $0x4] sm:$0x1]
      %v169 = vld [vmem:[#allocation2 + $0xd] sm:$0x1]
      %v170 = vld [vmem:[#allocation8 + $0x4] sm:$0x1]
      %v171 = vadd.f32 %v165, %v169
      %v172 = vmul.f32 %v168, %v171
      %vm173 = vcmp.lt.f32.partialorder %v170, %v172
      %v174 = vsel %vm173, %v168, 0.0
      %v175 = vsel %vm173, 1, 0
      %176 = vst [vmem:[#allocation9 + $0x4] sm:$0x1] %v175
      %v177 = vld [vmem:[#allocation3 + $0x5] sm:$0x1]
      %v178 = vld [vmem:[#allocation2 + $0xe] sm:$0x1]
      %v179 = vld [vmem:[#allocation8 + $0x5] sm:$0x1]
      %v180 = vadd.f32 %v174, %v178
      %v181 = vmul.f32 %v177, %v180
      %vm182 = vcmp.lt.f32.partialorder %v179, %v181
      %v183 = vsel %vm182, %v177, 0.0
      %v184 = vsel %vm182, 1, 0
      %185 = vst [vmem:[#allocation9 + $0x5] sm:$0x1] %v184
      %v186 = vld [vmem:[#allocation3 + $0x6] sm:$0x1]
      %v187 = vld [vmem:[#allocation2 + $0xf] sm:$0x1]
      %v188 = vld [vmem:[#allocation8 + $0x6] sm:$0x1]
      %v189 = vadd.f32 %v183, %v187
      %v190 = vmul.f32 %v186, %v189
      %vm191 = vcmp.lt.f32.partialorder %v188, %v190
      %v192 = vsel %vm191, %v186, 0.0
      %v193 = vsel %vm191, 1, 0
      %194 = vst [vmem:[#allocation9 + $0x6] sm:$0x1] %v193
      %v195 = vld [vmem:[#allocation3 + $0x7] sm:$0x1]
      %v196 = vld [vmem:[#allocation2 + $0x10] sm:$0x1]
      %v197 = vld [vmem:[#allocation8 + $0x7] sm:$0x1]
      %v198 = vadd.f32 %v192, %v196
      %v199 = vmul.f32 %v195, %v198
      %vm200 = vcmp.lt.f32.partialorder %v197, %v199
      %v201 = vsel %vm200, 1, 0
      %202 = vst [vmem:[#allocation9 + $0x7] sm:$0x1] %v201
    $region37: #{tpu_custom_call.1} parent=1 // pred_fallthru
      _
    // Predicated region
    $region38: #{tpu_custom_call.1} parent=1 // pred_check
      _
    $region39: #{tpu_custom_call.1} parent=1 // pred_check_branch
      %204 = sbr.rel (0) target = $region41
    $region40: #{tpu_custom_call.1} parent=1 // pred_region
      %s206 = ssub.s32 128, 128
      %207 = vsyncadd [#allocation5], %s206
      %s209 = sshll.u32 [#allocation9], 4
      %s210 = int_to_ptr.vmem [resolvable:$true] %s209
      %212 = dma.vmem_to_hbm [thread:$0]  %s210, 128, %s3, [#allocation5]
    $region41: #{tpu_custom_call.1} parent=1 // pred_fallthru
      _
    // Predicated region
    $region42: #{tpu_custom_call.1} parent=1 // pred_check
      _
    $region43: #{tpu_custom_call.1} parent=1 // pred_check_branch
      %214 = sbr.rel (0) target = $region45
    $region44: #{tpu_custom_call.1} parent=1 // pred_region
      %215 = dma.done [#allocation5], 128
    $region45: #{tpu_custom_call.1} parent=1 // pred_fallthru
      _
    %216 = vsyncpa [#allocation4], 1
    %217 = vsyncpa [#allocation7], 1
    %218 = vsyncpa [#allocation5], 1

</llo_original>
